<compile_context>
chip_gen: v6e
topology: v6e:2x2x1
jax: 0.10.0
libtpu: 0.0.40
codegen_flags: <defaults>
</compile_context>

<pallas_src>
import jax
import jax.numpy as jnp
from jax import lax
from jax.experimental import pallas as pl
from jax.experimental.pallas import tpu as pltpu


_LANE = 128
_MAX_BLOCK_B = 16384        # f32 x tile: 2 x 8 MiB double-buffered (11 lanes pad to 128)
_SMALL_BATCH_BYPASS = 1024  # below this, fused XLA matmuls beat a custom call


def mlp_kernel(x_ref, w1_ref, b1_ref, w2_ref, b2_ref, o_ref):
    """One batch tile:  o = W2 @ relu(W1 @ x^T + b1) + b2   (feature-major output).

    x_ref is the native row-major (block_b, in) tile.  Contracting the feature
    axis of both operands makes Mosaic insert the small XLU transpose of the x
    tile (XLU slots are idle in this kernel); h and y are then lane-dense with
    the batch on the 128-wide lane axis, giving unmasked vector stores.
    """
    h = lax.dot_general(
        w1_ref[...], x_ref[...],
        dimension_numbers=(((1,), (1,)), ((), ())),
        preferred_element_type=jnp.float32)                 # (hidden, block_b) f32
    h = jnp.maximum(h + b1_ref[...], 0.0)                   # bias + ReLU in f32 (post-MXU, v5e-safe)
    y = jnp.dot(w2_ref[...], h,
                preferred_element_type=jnp.float32) + b2_ref[...]
    o_ref[...] = y.astype(o_ref.dtype)                      # (out, block_b) lane-dense store


def _pick_block_b(b_pad, cap=_MAX_BLOCK_B):
    """Largest power-of-two lane tile <= cap dividing b_pad; prefer an even grid (v7x 2 TCs)."""
    candidates = [c for c in (32768, 16384, 8192, 4096, 2048, 1024, 512, 256, 128)
                  if c <= cap]
    for c in candidates:                       # grid length >= 2 and even -> both v7x cores busy
        if b_pad % c == 0 and (b_pad // c) >= 2 and (b_pad // c) % 2 == 0:
            return c
    for c in candidates:                       # else any grid length >= 2
        if b_pad % c == 0 and (b_pad // c) >= 2:
            return c
    return b_pad                               # tiny padded batch (128): single block


def linear_qnet_forward(x, w1, b1, w2, b2, *, block_b=None, use_kernel=None,
                        feature_major_out=False):
    """Forward pass of Linear_QNet: relu(x @ W1.T + b1) @ W2.T + b2.

    PyTorch nn.Linear conventions:
      x : (B, input_size)
      w1: (hidden_size, input_size)   b1: (hidden_size,)
      w2: (output_size, hidden_size)  b2: (output_size,)
    Returns (B, output_size) float32, or (output_size, B) if feature_major_out.

    x is read in its native (B, in) layout (no wrapper transpose / cast pass).
    If x already lives in bf16 at the source it is used as-is (w1 is cast once
    in the wrapper to match); bias + ReLU stay in f32 post-MXU.
    """
    B, in_size = x.shape
    hidden = w1.shape[0]
    out_size = w2.shape[0]
    assert w1.shape == (hidden, in_size)
    assert b1.shape == (hidden,)
    assert w2.shape == (out_size, hidden)
    assert b2.shape == (out_size,)

    if use_kernel is None:
        use_kernel = B >= _SMALL_BATCH_BYPASS
    if not use_kernel:
        # Per-step inference sizes: custom-call + DMA setup dominates; let XLA fuse it.
        h = jnp.maximum(x.astype(jnp.float32) @ w1.T + b1, 0.0)
        y = h @ w2.T + b2
        return y.T if feature_major_out else y

    # Pad the batch to a lane multiple so tiles stay bounded and lane-aligned
    # (never one giant block that could exceed the scoped VMEM limit).
    b_pad = pl.cdiv(B, _LANE) * _LANE
    if block_b is None:
        block_b = _pick_block_b(b_pad)
    else:
        assert block_b % _LANE == 0, "block_b must be a multiple of 128"
        b_pad = pl.cdiv(b_pad, block_b) * block_b
    if b_pad != B:
        x = jnp.pad(x, ((0, b_pad - B), (0, 0)))
    grid = (b_pad // block_b,)

    # One-time wrapper-side casts (tiny) so the kernel does no per-step casting.
    mm_dtype = jnp.bfloat16 if x.dtype == jnp.bfloat16 else jnp.float32
    x = x.astype(mm_dtype)
    w1c = w1.astype(mm_dtype)
    w2c = w2.astype(jnp.float32)
    b1c = b1.reshape(hidden, 1).astype(jnp.float32)
    b2c = b2.reshape(out_size, 1).astype(jnp.float32)

    yt = pl.pallas_call(
        mlp_kernel,
        out_shape=jax.ShapeDtypeStruct((out_size, b_pad), jnp.float32),
        grid=grid,
        in_specs=[
            # x streams through in its native layout: each block is one
            # contiguous HBM span of block_b rows.
            pl.BlockSpec((block_b, in_size), lambda i: (i, 0)),
            # Weights / biases: constant index maps -> DMA'd once, VMEM-resident.
            pl.BlockSpec((hidden, in_size), lambda i: (0, 0)),
            pl.BlockSpec((hidden, 1), lambda i: (0, 0)),
            pl.BlockSpec((out_size, hidden), lambda i: (0, 0)),
            pl.BlockSpec((out_size, 1), lambda i: (0, 0)),
        ],
        # Lane-dense output slab (batch on the lane axis -> unmasked stores).
        out_specs=pl.BlockSpec((out_size, block_b), lambda i: (0, i)),
        compiler_params=pltpu.CompilerParams(
            dimension_semantics=("parallel",),   # megacore split on v7x
            vmem_limit_bytes=32 << 20,           # headroom over v5e's 16 MiB default
        ),
    )(x, w1c, b1c, w2c, b2c)

    yt = yt[:, :B]
    return yt if feature_major_out else yt.T


def init_params(key, input_size, hidden_size, output_size):
    """Mimic nn.Linear's uniform(-1/sqrt(fan_in), 1/sqrt(fan_in)) init (PyTorch layout)."""
    k1, k2, k3, k4 = jax.random.split(key, 4)
    bound1 = 1.0 / (input_size ** 0.5)
    bound2 = 1.0 / (hidden_size ** 0.5)
    w1 = jax.random.uniform(k1, (hidden_size, input_size), jnp.float32, -bound1, bound1)
    b1 = jax.random.uniform(k2, (hidden_size,), jnp.float32, -bound1, bound1)
    w2 = jax.random.uniform(k3, (output_size, hidden_size), jnp.float32, -bound2, bound2)
    b2 = jax.random.uniform(k4, (output_size,), jnp.float32, -bound2, bound2)
    return w1, b1, w2, b2


def _reference(x, w1, b1, w2, b2):
    # Same math as the PyTorch forward (nn.Linear: x @ W.T + b).
    return jnp.maximum(x @ w1.T + b1, 0.0) @ w2.T + b2


# TODO(synk): Linear_QNet.save() is torch.save / filesystem I/O — host-side, no kernel equivalent.

if __name__ == "__main__":
    # Snake-AI sizes: 11 state features -> 32 hidden -> 3 actions.
    input_size, hidden_size, output_size = 11, 32, 3

    key = jax.random.PRNGKey(0)
    kx1, kx2, kp = jax.random.split(key, 3)
    w1, b1, w2, b2 = init_params(kp, input_size, hidden_size, output_size)

    # 1) Tiny batch forced through the kernel (zero-padded to one 128-lane block, grid=(1,)).
    x_small = jax.random.normal(kx1, (8, input_size), jnp.float32)
    out_small = jax.block_until_ready(
        linear_qnet_forward(x_small, w1, b1, w2, b2, use_kernel=True))
    ref_small = _reference(x_small, w1, b1, w2, b2)
    assert out_small.shape == (8, output_size)
    assert jnp.allclose(out_small, ref_small, atol=1e-4, rtol=1e-4)

    # 2) Non-128-divisible batch: exercises zero-padding + multi-step grid
    #    (300 -> padded 384 -> grid=(3,)) with VMEM-resident weights.
    x_mid = jax.random.normal(kx2, (300, input_size), jnp.float32)
    out_mid = jax.block_until_ready(
        linear_qnet_forward(x_mid, w1, b1, w2, b2, use_kernel=True))
    ref_mid = _reference(x_mid, w1, b1, w2, b2)
    assert out_mid.shape == (300, output_size)
    assert jnp.allclose(out_mid, ref_mid, atol=1e-4, rtol=1e-4)

    # 3) Auto path for per-step inference (B=1): bypasses the custom call entirely.
    x_one = x_small[:1]
    out_one = jax.block_until_ready(linear_qnet_forward(x_one, w1, b1, w2, b2))
    assert out_one.shape == (1, output_size)
    assert jnp.allclose(out_one, _reference(x_one, w1, b1, w2, b2), atol=1e-4, rtol=1e-4)

    print("KERNEL_OK")
</pallas_src>

<mosaic_0001>
module attributes {stable_mosaic.version = 11 : i64} {
  func.func @mlp_kernel(%arg0: i32, %arg1: memref<128x11xf32, #tpu.memory_space<vmem>>, %arg2: memref<32x11xf32, #tpu.memory_space<vmem>>, %arg3: memref<32x1xf32, #tpu.memory_space<vmem>>, %arg4: memref<3x32xf32, #tpu.memory_space<vmem>>, %arg5: memref<3x1xf32, #tpu.memory_space<vmem>>, %arg6: memref<3x128xf32, #tpu.memory_space<vmem>>) attributes {dimension_semantics = [#tpu.dimension_semantics<parallel>], iteration_bounds = array<i64: 1>, scalar_prefetch = 0 : i64, scratch_operands = 0 : i64, tpu.core_type = #tpu.core_type<tc>, window_params = [{transform_indices = @transform_0, window_bounds = array<i64: 128, 11>}, {pipeline_mode = #tpu.pipeline_mode<synchronous>, transform_indices = @transform_1, window_bounds = array<i64: 32, 11>}, {pipeline_mode = #tpu.pipeline_mode<synchronous>, transform_indices = @transform_2, window_bounds = array<i64: 32, 1>}, {pipeline_mode = #tpu.pipeline_mode<synchronous>, transform_indices = @transform_3, window_bounds = array<i64: 3, 32>}, {pipeline_mode = #tpu.pipeline_mode<synchronous>, transform_indices = @transform_4, window_bounds = array<i64: 3, 1>}, {transform_indices = @transform_5, window_bounds = array<i64: 3, 128>}]} {
    %c0 = arith.constant 0 : index
    %c0_0 = arith.constant 0 : index
    %0 = vector.load %arg2[%c0, %c0_0] : memref<32x11xf32, #tpu.memory_space<vmem>>, vector<32x11xf32>
    %c0_1 = arith.constant 0 : index
    %c0_2 = arith.constant 0 : index
    %1 = vector.load %arg1[%c0_1, %c0_2] : memref<128x11xf32, #tpu.memory_space<vmem>>, vector<128x11xf32>
    %cst = arith.constant dense<0.000000e+00> : vector<32x128xf32>
    %2 = tpu.matmul %0, %1, %cst {dimension_numbers = #tpu.dot_dimension_numbers<[1], [1], [0], [0], [0, 0, 1, 0], [], []>} : vector<32x11xf32>, vector<128x11xf32>, vector<32x128xf32> -> vector<32x128xf32>
    %c0_3 = arith.constant 0 : index
    %c0_4 = arith.constant 0 : index
    %3 = vector.load %arg3[%c0_3, %c0_4] : memref<32x1xf32, #tpu.memory_space<vmem>>, vector<32x1xf32>
    %4 = vector.broadcast %3 : vector<32x1xf32> to vector<32x128xf32>
    %5 = arith.addf %2, %4 : vector<32x128xf32>
    %cst_5 = arith.constant 0.000000e+00 : f32
    %6 = vector.broadcast %cst_5 : f32 to vector<32x128xf32>
    %7 = arith.maximumf %5, %6 : vector<32x128xf32>
    %c0_6 = arith.constant 0 : index
    %c0_7 = arith.constant 0 : index
    %8 = vector.load %arg4[%c0_6, %c0_7] : memref<3x32xf32, #tpu.memory_space<vmem>>, vector<3x32xf32>
    %cst_8 = arith.constant dense<0.000000e+00> : vector<3x128xf32>
    %9 = tpu.matmul %8, %7, %cst_8 {dimension_numbers = #tpu.dot_dimension_numbers<[1], [0], [0], [1], [0, 0, 1, 1], [], []>} : vector<3x32xf32>, vector<32x128xf32>, vector<3x128xf32> -> vector<3x128xf32>
    %c0_9 = arith.constant 0 : index
    %c0_10 = arith.constant 0 : index
    %10 = vector.load %arg5[%c0_9, %c0_10] : memref<3x1xf32, #tpu.memory_space<vmem>>, vector<3x1xf32>
    %11 = vector.broadcast %10 : vector<3x1xf32> to vector<3x128xf32>
    %12 = arith.addf %9, %11 : vector<3x128xf32>
    %c0_11 = arith.constant 0 : index
    %c0_12 = arith.constant 0 : index
    %13 = vector.load %arg6[%c0_11, %c0_12] : memref<3x128xf32, #tpu.memory_space<vmem>>, vector<3x128xf32>
    tpu.vector_store %arg6[%c0_11, %c0_12], %12 {strides = array<i32>} : memref<3x128xf32, #tpu.memory_space<vmem>>, vector<3x128xf32>,
    return
  }
  func.func @transform_0(%arg0: i32) -> (i32, i32) {
    %c0_i32 = arith.constant 0 : i32
    %c0_i32_0 = arith.constant 0 : i32
    return %arg0, %c0_i32 : i32, i32
  }
  func.func @transform_1(%arg0: i32) -> (i32, i32) {
    %c0_i32 = arith.constant 0 : i32
    %c0_i32_0 = arith.constant 0 : i32
    %c0_i32_1 = arith.constant 0 : i32
    return %c0_i32, %c0_i32_0 : i32, i32
  }
  func.func @transform_2(%arg0: i32) -> (i32, i32) {
    %c0_i32 = arith.constant 0 : i32
    %c0_i32_0 = arith.constant 0 : i32
    %c0_i32_1 = arith.constant 0 : i32
    return %c0_i32, %c0_i32_0 : i32, i32
  }
  func.func @transform_3(%arg0: i32) -> (i32, i32) {
    %c0_i32 = arith.constant 0 : i32
    %c0_i32_0 = arith.constant 0 : i32
    %c0_i32_1 = arith.constant 0 : i32
    return %c0_i32, %c0_i32_0 : i32, i32
  }
  func.func @transform_4(%arg0: i32) -> (i32, i32) {
    %c0_i32 = arith.constant 0 : i32
    %c0_i32_0 = arith.constant 0 : i32
    %c0_i32_1 = arith.constant 0 : i32
    return %c0_i32, %c0_i32_0 : i32, i32
  }
  func.func @transform_5(%arg0: i32) -> (i32, i32) {
    %c0_i32 = arith.constant 0 : i32
    %c0_i32_0 = arith.constant 0 : i32
    return %c0_i32, %arg0 : i32, i32
  }
}

</mosaic_0001>

<llo_original>
// kernel: tpu_custom_call.1
$region0: #{tpu_custom_call.1}
  #allocation0 [shape = 'u32[]', space=smem, size = 0x4, offset = 0x4, fixed_abs, tag = 'smem constant byte address 0x4 - core index']
  #allocation1 [shape = 'u32[144,128]{1,0:T(1,128)}', space=vmem, size = 0x12000, scoped, tag = 'internal scratch']
  %s0 = inlined_call_operand.vmem [shape: f32[128,11], index: 0, kind: input, shape index: {}]
  %s1 = inlined_call_operand.vmem [shape: f32[32,11], index: 1, kind: input, shape index: {}]
  %s2 = inlined_call_operand.vmem [shape: f32[32,1], index: 2, kind: input, shape index: {}]
  %s3 = inlined_call_operand.vmem [shape: f32[3,32], index: 3, kind: input, shape index: {}]
  %s4 = inlined_call_operand.vmem [shape: f32[3,1], index: 4, kind: input, shape index: {}]
  %s5 = inlined_call_operand.hbm [shape: f32[3,128], index: 5, kind: output, shape index: {}]
  %s6 = sld [smem:[#allocation0]]
  $region30: #{tpu_custom_call.1} parent=0
    _
  %s8 = ssub.s32 1, %s6
  %s9 = scalar_select 0, %s8, %s6
  $region1: #{tpu_custom_call.1} parent=0
    #allocation2 [shape = 'u8[2048]{0}', space=vmem, size = 0x800, scoped, tag = 'output window, operand 0, single buffered']
    #allocation3 [shape = 's32[1]{0}', space=sflag, size = 0x4, scoped, tag = 'scoped memory for tpu_custom_call.1']
    %10 = vsyncpa [#allocation3], 0
    // Predicated region
    $region2: #{tpu_custom_call.1} parent=1 // pred_check
      _
    $region3: #{tpu_custom_call.1} parent=1 // pred_check_branch
      %12 = sbr.rel (0) target = $region5
    $region4: #{tpu_custom_call.1} parent=1 // pred_region
      _
    $region5: #{tpu_custom_call.1} parent=1 // pred_fallthru
      _
    // Predicated region
    $region6: #{tpu_custom_call.1} parent=1 // pred_check
      _
    $region7: #{tpu_custom_call.1} parent=1 // pred_check_branch
      %14 = sbr.rel (0) target = $region9
    $region8: #{tpu_custom_call.1} parent=1 // pred_region
      _
    $region9: #{tpu_custom_call.1} parent=1 // pred_fallthru
      _
    // Predicated region
    $region10: #{tpu_custom_call.1} parent=1 // pred_check
      _
    $region11: #{tpu_custom_call.1} parent=1 // pred_check_branch
      %16 = sbr.rel (0) target = $region13
    $region12: #{tpu_custom_call.1} parent=1 // pred_region
      _
    $region13: #{tpu_custom_call.1} parent=1 // pred_fallthru
      _
    // Predicated region
    $region14: #{tpu_custom_call.1} parent=1 // pred_check
      _
    $region15: #{tpu_custom_call.1} parent=1 // pred_check_branch
      %18 = sbr.rel (0) target = $region17
    $region16: #{tpu_custom_call.1} parent=1 // pred_region
      _
    $region17: #{tpu_custom_call.1} parent=1 // pred_fallthru
      _
    // Predicated region
    $region18: #{tpu_custom_call.1} parent=1 // pred_check
      _
    $region19: #{tpu_custom_call.1} parent=1 // pred_check_branch
      %20 = sbr.rel (0) target = $region21
    $region20: #{tpu_custom_call.1} parent=1 // pred_region
      _
    $region21: #{tpu_custom_call.1} parent=1 // pred_fallthru
      _
    %v21 = vld [vmem:[%s1] sm:$0xff]
    %v22 = vld [vmem:[%s1 + $0x8] sm:$0xff]
    %v23 = vld [vmem:[%s1 + $0x10] sm:$0xff]
    %v24 = vld [vmem:[%s1 + $0x18] sm:$0xff]
    %v25 = vld [vmem:[%s0] sm:$0xff]
    %v26 = vld [vmem:[%s0 + $0x8] sm:$0xff]
    %v27 = vld [vmem:[%s0 + $0x10] sm:$0xff]
    %v28 = vld [vmem:[%s0 + $0x18] sm:$0xff]
    %v29 = vld [vmem:[%s0 + $0x20] sm:$0xff]
    %v30 = vld [vmem:[%s0 + $0x28] sm:$0xff]
    %v31 = vld [vmem:[%s0 + $0x30] sm:$0xff]
    %v32 = vld [vmem:[%s0 + $0x38] sm:$0xff]
    %v33 = vld [vmem:[%s0 + $0x40] sm:$0xff]
    %v34 = vld [vmem:[%s0 + $0x48] sm:$0xff]
    %v35 = vld [vmem:[%s0 + $0x50] sm:$0xff]
    %v36 = vld [vmem:[%s0 + $0x58] sm:$0xff]
    %v37 = vld [vmem:[%s0 + $0x60] sm:$0xff]
    %v38 = vld [vmem:[%s0 + $0x68] sm:$0xff]
    %v39 = vld [vmem:[%s0 + $0x70] sm:$0xff]
    %v40 = vld [vmem:[%s0 + $0x78] sm:$0xff]
    %v41 = vld [vmem:[%s2] sm:$0xff]
    %v42 = vld [vmem:[%s2 + $0x8] sm:$0xff]
    %v43 = vld [vmem:[%s2 + $0x10] sm:$0xff]
    %v44 = vld [vmem:[%s2 + $0x18] sm:$0xff]
    %46 = vset.pattern.permute.xlu0 0
    %47 = vperm.xlu0 %46, %v41
    %v48 = vpop.permute.xlu0 %47
    %51 = vset.pattern.permute.xlu0 0
    %52 = vperm.xlu0 %51, %v42
    %v53 = vpop.permute.xlu0 %52
    %56 = vset.pattern.permute.xlu0 0
    %57 = vperm.xlu0 %56, %v43
    %v58 = vpop.permute.xlu0 %57
    %61 = vset.pattern.permute.xlu0 0
    %62 = vperm.xlu0 %61, %v44
    %v63 = vpop.permute.xlu0 %62
    %vm65 = vcmask 89088
    %v67 = vsel %vm65, %v21, 0
    %v70 = vsel %vm65, %v22, 0
    %v73 = vsel %vm65, %v23, 0
    %v76 = vsel %vm65, %v24, 0
    %v79 = vsel %vm65, %v25, 0
    %v82 = vsel %vm65, %v26, 0
    %v85 = vsel %vm65, %v27, 0
    %v88 = vsel %vm65, %v28, 0
    %v91 = vsel %vm65, %v29, 0
    %v94 = vsel %vm65, %v30, 0
    %v97 = vsel %vm65, %v31, 0
    %v100 = vsel %vm65, %v32, 0
    %v103 = vsel %vm65, %v33, 0
    %v106 = vsel %vm65, %v34, 0
    %v109 = vsel %vm65, %v35, 0
    %v112 = vsel %vm65, %v36, 0
    %v115 = vsel %vm65, %v37, 0
    %v118 = vsel %vm65, %v38, 0
    %v121 = vsel %vm65, %v39, 0
    %v124 = vsel %vm65, %v40, 0
    %126 = vmatprep.subr.mxu0 0.0
    %127 = vmatpush1.xpose.msra.mxu0 %v124
    %128 = vmatprep.subr.mxu0 0.0
    %129 = vmatpush1.xpose.msra.mxu0 %v121
    %130 = vmatprep.subr.mxu0 0.0
    %131 = vmatpush1.xpose.msra.mxu0 %v118
    %132 = vmatprep.subr.mxu0 0.0
    %133 = vmatpush1.xpose.msra.mxu0 %v115
    %134 = vmatprep.subr.mxu0 0.0
    %135 = vmatpush1.xpose.msra.mxu0 %v112
    %136 = vmatprep.subr.mxu0 0.0
    %137 = vmatpush1.xpose.msra.mxu0 %v109
    %138 = vmatprep.subr.mxu0 0.0
    %139 = vmatpush1.xpose.msra.mxu0 %v106
    %140 = vmatprep.subr.mxu0 0.0
    %141 = vmatpush1.xpose.msra.mxu0 %v103
    %142 = vmatprep.subr.mxu0 0.0
    %143 = vmatpush1.xpose.msra.mxu0 %v100
    %144 = vmatprep.subr.mxu0 0.0
    %145 = vmatpush1.xpose.msra.mxu0 %v97
    %146 = vmatprep.subr.mxu0 0.0
    %147 = vmatpush1.xpose.msra.mxu0 %v94
    %148 = vmatprep.subr.mxu0 0.0
    %149 = vmatpush1.xpose.msra.mxu0 %v91
    %150 = vmatprep.subr.mxu0 0.0
    %151 = vmatpush1.xpose.msra.mxu0 %v88
    %152 = vmatprep.subr.mxu0 0.0
    %153 = vmatpush1.xpose.msra.mxu0 %v85
    %154 = vmatprep.subr.mxu0 0.0
    %155 = vmatpush1.xpose.msra.mxu0 %v82
    %156 = vmatprep.subr.mxu0 0.0
    %157 = vmatpush1.xpose.msra.mxu0 %v79
    %158 = vmatprep.subr.mxu0 0.0
    %159 = vmatpush2.xpose.msra.mxu0 0.0
    %160 = vmatprep.subr.mxu0 0.0
    %161 = vmatpush2.xpose.msra.mxu0 0.0
    %162 = vmatprep.subr.mxu0 0.0
    %163 = vmatpush2.xpose.msra.mxu0 0.0
    %164 = vmatprep.subr.mxu0 0.0
    %165 = vmatpush2.xpose.msra.mxu0 0.0
    %166 = vmatprep.subr.mxu0 0.0
    %167 = vmatpush2.xpose.msra.mxu0 0.0
    %168 = vmatprep.subr.mxu0 0.0
    %169 = vmatpush2.xpose.msra.mxu0 0.0
    %170 = vmatprep.subr.mxu0 0.0
    %171 = vmatpush2.xpose.msra.mxu0 0.0
    %172 = vmatprep.subr.mxu0 0.0
    %173 = vmatpush2.xpose.msra.mxu0 0.0
    %174 = vmatprep.subr.mxu0 0.0
    %175 = vmatpush2.xpose.msra.mxu0 0.0
    %176 = vmatprep.subr.mxu0 0.0
    %177 = vmatpush2.xpose.msra.mxu0 0.0
    %178 = vmatprep.subr.mxu0 0.0
    %179 = vmatpush2.xpose.msra.mxu0 0.0
    %180 = vmatprep.subr.mxu0 0.0
    %181 = vmatpush2.xpose.msra.mxu0 0.0
    %182 = vmatprep.subr.mxu0 0.0
    %183 = vmatpush2.xpose.msra.mxu0 0.0
    %184 = vmatprep.subr.mxu0 0.0
    %185 = vmatpush2.xpose.msra.mxu0 0.0
    %186 = vmatprep.subr.mxu0 0.0
    %187 = vmatpush2.xpose.msra.mxu0 0.0
    %188 = vmatprep.subr.mxu0 0.0
    %189 = vmatpush2.xpose.msra.mxu0 0.0
    %190 = vmatprep.mubr.f32.mxu0 0.0
    %191 = vmatmul.mubr.f32.gmra.mxu0 %v67
    %v192 = vpop.f32.mrf.mxu0
    %v193 = vadd.f32 %v48, %v192
    %v194 = vpop.f32.mrf.mxu0
    %195 = vmatprep.mubr.f32.mxu0 0.0
    %196 = vmatmul.mubr.f32.gmra.mxu0 %v70
    %v197 = vpop.f32.mrf.mxu0
    %v198 = vadd.f32 %v53, %v197
    %v199 = vpop.f32.mrf.mxu0
    %200 = vmatprep.mubr.f32.mxu0 0.0
    %201 = vmatmul.mubr.f32.gmra.mxu0 %v73
    %v202 = vpop.f32.mrf.mxu0
    %v203 = vadd.f32 %v58, %v202
    %v204 = vpop.f32.mrf.mxu0
    %205 = vmatprep.mubr.f32.mxu0 0.0
    %206 = vmatmul.mubr.f32.gmra.mxu0 %v76
    %v207 = vpop.f32.mrf.mxu0
    %v208 = vadd.f32 %v63, %v207
    %v209 = vpop.f32.mrf.mxu0
    %210 = vdwg.mxu0
    %v211 = vmax.f32 %v193, 0.0
    %v212 = vmax.f32 %v198, 0.0
    %v213 = vmax.f32 %v203, 0.0
    %v214 = vmax.f32 %v208, 0.0
    %v215 = vld [vmem:[%s3] sm:$0x7]
    %v216 = vld [vmem:[%s4] sm:$0x7]
    %218 = vset.pattern.permute.xlu0 0
    %219 = vperm.xlu0 %218, %v216
    %v220 = vpop.permute.xlu0 %219
    %vm222 = vcmask 261120
    %v224 = vsel %vm222, %v215, 0
    %226 = vmatprep.subr.mxu0 0.0
    %227 = vmatpush1.msra.mxu0 0.0
    %228 = vmatprep.subr.mxu0 0.0
    %229 = vmatpush1.msra.mxu0 0.0
    %230 = vmatprep.subr.mxu0 0.0
    %231 = vmatpush1.msra.mxu0 0.0
    %232 = vmatprep.subr.mxu0 0.0
    %233 = vmatpush1.msra.mxu0 0.0
    %234 = vmatprep.subr.mxu0 0.0
    %235 = vmatpush1.msra.mxu0 0.0
    %236 = vmatprep.subr.mxu0 0.0
    %237 = vmatpush1.msra.mxu0 0.0
    %238 = vmatprep.subr.mxu0 0.0
    %239 = vmatpush1.msra.mxu0 0.0
    %240 = vmatprep.subr.mxu0 0.0
    %241 = vmatpush1.msra.mxu0 0.0
    %242 = vmatprep.subr.mxu0 0.0
    %243 = vmatpush1.msra.mxu0 0.0
    %244 = vmatprep.subr.mxu0 0.0
    %245 = vmatpush1.msra.mxu0 0.0
    %246 = vmatprep.subr.mxu0 0.0
    %247 = vmatpush1.msra.mxu0 0.0
    %248 = vmatprep.subr.mxu0 0.0
    %249 = vmatpush1.msra.mxu0 0.0
    %250 = vmatprep.subr.mxu0 0.0
    %251 = vmatpush1.msra.mxu0 %v214
    %252 = vmatprep.subr.mxu0 0.0
    %253 = vmatpush1.msra.mxu0 %v213
    %254 = vmatprep.subr.mxu0 0.0
    %255 = vmatpush1.msra.mxu0 %v212
    %256 = vmatprep.subr.mxu0 0.0
    %257 = vmatpush1.msra.mxu0 %v211
    %258 = vmatprep.subr.mxu0 0.0
    %259 = vmatpush2.msra.mxu0 0.0
    %260 = vmatprep.subr.mxu0 0.0
    %261 = vmatpush2.msra.mxu0 0.0
    %262 = vmatprep.subr.mxu0 0.0
    %263 = vmatpush2.msra.mxu0 0.0
    %264 = vmatprep.subr.mxu0 0.0
    %265 = vmatpush2.msra.mxu0 0.0
    %266 = vmatprep.subr.mxu0 0.0
    %267 = vmatpush2.msra.mxu0 0.0
    %268 = vmatprep.subr.mxu0 0.0
    %269 = vmatpush2.msra.mxu0 0.0
    %270 = vmatprep.subr.mxu0 0.0
    %271 = vmatpush2.msra.mxu0 0.0
    %272 = vmatprep.subr.mxu0 0.0
    %273 = vmatpush2.msra.mxu0 0.0
    %274 = vmatprep.subr.mxu0 0.0
    %275 = vmatpush2.msra.mxu0 0.0
    %276 = vmatprep.subr.mxu0 0.0
    %277 = vmatpush2.msra.mxu0 0.0
    %278 = vmatprep.subr.mxu0 0.0
    %279 = vmatpush2.msra.mxu0 0.0
    %280 = vmatprep.subr.mxu0 0.0
    %281 = vmatpush2.msra.mxu0 0.0
    %282 = vmatprep.subr.mxu0 0.0
    %283 = vmatpush2.msra.mxu0 0.0
    %284 = vmatprep.subr.mxu0 0.0
    %285 = vmatpush2.msra.mxu0 0.0
    %286 = vmatprep.subr.mxu0 0.0
    %287 = vmatpush2.msra.mxu0 0.0
    %288 = vmatprep.subr.mxu0 0.0
    %289 = vmatpush2.msra.mxu0 0.0
    %290 = vmatprep.mubr.f32.mxu0 0.0
    %291 = vmatmul.mubr.f32.gmra.mxu0 %v224
    %v292 = vpop.f32.mrf.mxu0
    %v293 = vadd.f32 %v220, %v292
    %v294 = vpop.f32.mrf.mxu0
    %295 = vdwg.mxu0
    %296 = vst [vmem:[#allocation2] sm:$0x7] %v293
    // Predicated region
    $region22: #{tpu_custom_call.1} parent=1 // pred_check
      _
    $region23: #{tpu_custom_call.1} parent=1 // pred_check_branch
      %298 = sbr.rel (0) target = $region25
    $region24: #{tpu_custom_call.1} parent=1 // pred_region
      %s300 = ssub.s32 64, 64
      %301 = vsyncadd [#allocation3], %s300
      %s303 = sshll.u32 [#allocation2], 4
      %s304 = int_to_ptr.vmem [resolvable:$true] %s303
      %306 = dma.vmem_to_hbm [thread:$0]  %s304, 64, %s5, [#allocation3]
    $region25: #{tpu_custom_call.1} parent=1 // pred_fallthru
      _
    // Predicated region
    $region26: #{tpu_custom_call.1} parent=1 // pred_check
      _
    $region27: #{tpu_custom_call.1} parent=1 // pred_check_branch
      %308 = sbr.rel (0) target = $region29
    $region28: #{tpu_custom_call.1} parent=1 // pred_region
      %309 = dma.done [#allocation3], 64
    $region29: #{tpu_custom_call.1} parent=1 // pred_fallthru
      _
    %310 = vsyncpa [#allocation3], 1

</llo_original>
